<compile_context>
chip_gen: v6e
topology: v6e:2x2x1
jax: 0.10.0
libtpu: 0.0.40
codegen_flags: <defaults>
</compile_context>

<pallas_src>
from functools import partial

import jax
import jax.numpy as jnp
from jax.experimental import pallas as pl
from jax.experimental.pallas import tpu as pltpu

LANE = 128                      # TPU vreg lane width
MAX_TN = 256                    # max rows per block (multiple of 8 and 16)
MAX_TD = 8192                   # max lanes per block (bounds chunk unrolling)
MAX_BLOCK_ELEMS = 256 * 2048    # ~2 MiB per f32 input block (v5e-safe)


# ----------------------------------------------------------------------------
# Pallas kernel: per-row partial sums of X*Y and X+Y over one (TN, TD) tile
# ----------------------------------------------------------------------------
def _wsd_kernel(pred_ref, lab_ref, sxy_ref, sxpy_ref, *,
                v1, v2, tile_d, apply_sigmoid):
    @pl.when(pl.program_id(2) == 0)
    def _():
        sxy_ref[...] = jnp.zeros_like(sxy_ref)
        sxpy_ref[...] = jnp.zeros_like(sxpy_ref)

    dv = v2 - v1
    # Fused per-128-lane-chunk compute + accumulate: keeps everything small
    # and register/VMEM friendly (no full-tile f32 intermediates).
    for lo in range(0, tile_d, LANE):
        hi = min(lo + LANE, tile_d)
        cw = hi - lo
        p = pred_ref[:, lo:hi].astype(jnp.float32)
        l = lab_ref[:, lo:hi].astype(jnp.float32)
        if apply_sigmoid:
            # sigmoid(x) = 0.5*tanh(0.5*x) + 0.5 : runs on the otherwise-idle
            # EUP slot and avoids jax.nn.sigmoid's extra compares/selects.
            p = 0.5 * jnp.tanh(0.5 * p) + 0.5
        w = l * dv + v1
        X = w * (2.0 * p - 1.0)
        Y = w * (2.0 * l - 1.0)
        sxy_ref[:, :cw] = sxy_ref[:, :cw] + X * Y
        sxpy_ref[:, :cw] = sxpy_ref[:, :cw] + (X + Y)


# ----------------------------------------------------------------------------
# Wrapper
# ----------------------------------------------------------------------------
def weighted_soft_dice_loss(predicted, label, *, v1=0.1, eps=1e-6, logits=False):
    """predicted, label: (N, 1, H, W) or (N, H, W). Returns scalar f32 loss."""
    if v1 < 0:
        raise ValueError(f"v1 must be positive valued. Got {v1}")
    if v1 > 0.5:
        raise ValueError(
            f"v1 cannot be larger than 0.5 because of 0 <= v1 <= v2 <= 1. Got {v1}")
    v2 = 1.0 - v1

    N = predicted.shape[0]
    pred2 = predicted.reshape(N, -1)     # contiguous reshape, no HBM copy
    lab2 = label.reshape(N, -1)
    D = pred2.shape[1]

    # ---- row tiling: never pad rows ----------------------------------------
    TN = N if N <= MAX_TN else MAX_TN
    row_tiles = -(-N // TN)

    # ---- column tiling: kernel covers the TD-aligned prefix of D only ------
    td_cap = min(MAX_TD, max(LANE, (MAX_BLOCK_ELEMS // TN) // LANE * LANE))
    if D <= td_cap:
        TD = D                            # single full-width tile (no 128 rule)
    else:
        lo_td = max(LANE, (td_cap // 4) // LANE * LANE)
        TD = 0
        for td in range(td_cap, lo_td - 1, -LANE):
            if D % td == 0:
                TD = td
                break
        if TD == 0:
            TD = td_cap                   # aligned prefix; tail done in wrapper
    grid_d = D // TD
    d_main = grid_d * TD
    tail = D - d_main

    # 2-way column-half split so a "parallel" axis has >= 2 blocks (v7x dual
    # TensorCore); harmless on single-TC chips.
    halves = 2 if (grid_d >= 2 and grid_d % 2 == 0) else 1
    inner = grid_d // halves

    kernel = partial(_wsd_kernel, v1=float(v1), v2=float(v2),
                     tile_d=int(TD), apply_sigmoid=bool(logits))

    acc_shape = jax.ShapeDtypeStruct((N, halves * LANE), jnp.float32)
    in_bytes = (pred2.size * pred2.dtype.itemsize
                + lab2.size * lab2.dtype.itemsize)
    cost = pl.CostEstimate(
        flops=10 * N * d_main,
        transcendentals=(N * d_main if logits else 0),
        bytes_accessed=in_bytes + 2 * N * halves * LANE * 4,
    )

    in_map = lambda i, h, j: (i, h * inner + j)
    out_map = lambda i, h, j: (i, h)

    sxy, sxpy = pl.pallas_call(
        kernel,
        out_shape=(acc_shape, acc_shape),
        grid_spec=pltpu.PrefetchScalarGridSpec(
            num_scalar_prefetch=0,
            grid=(row_tiles, halves, inner),
            in_specs=[
                pl.BlockSpec((TN, TD), in_map),
                pl.BlockSpec((TN, TD), in_map),
            ],
            out_specs=[
                pl.BlockSpec((TN, LANE), out_map),
                pl.BlockSpec((TN, LANE), out_map),
            ],
        ),
        compiler_params=pltpu.CompilerParams(
            dimension_semantics=("parallel", "parallel", "arbitrary"),
        ),
        cost_estimate=cost,
    )(pred2, lab2)

    inter = jnp.sum(sxy, axis=1)         # sum(X*Y) per row
    s_xpy = jnp.sum(sxpy, axis=1)        # sum(X) + sum(Y) per row

    if tail:  # ragged (< TD wide) column tail, summed once in plain JAX
        tp = pred2[:, d_main:].astype(jnp.float32)
        tl = lab2[:, d_main:].astype(jnp.float32)
        if logits:
            tp = jax.nn.sigmoid(tp)
        tw = tl * (v2 - v1) + v1
        tX = tw * (2.0 * tp - 1.0)
        tY = tw * (2.0 * tl - 1.0)
        inter = inter + jnp.sum(tX * tY, axis=1)
        s_xpy = s_xpy + jnp.sum(tX + tY, axis=1)

    dice = (2.0 * inter + eps) / (s_xpy + eps)
    return jnp.mean(1.0 - dice)


# ----------------------------------------------------------------------------
# Pure-JAX reference (mirrors the PyTorch module)
# ----------------------------------------------------------------------------
def _reference(pred, lab, v1=0.1, eps=1e-6, logits=False):
    v2 = 1.0 - v1
    p = pred.astype(jnp.float32)
    if logits:
        p = jax.nn.sigmoid(p)
    p = p.reshape(p.shape[0], -1)
    l = lab.reshape(lab.shape[0], -1).astype(jnp.float32)
    w = l * (v2 - v1) + v1
    X = w * (2.0 * p - 1.0)
    Y = w * (2.0 * l - 1.0)
    inter = jnp.sum(X * Y, axis=1)
    dice = (2.0 * inter + eps) / (jnp.sum(X, axis=1) + jnp.sum(Y, axis=1) + eps)
    return jnp.mean(1.0 - dice)


if __name__ == "__main__":
    key = jax.random.PRNGKey(0)

    cases = [
        # (shape, logits) -- small shapes exercising all tiling paths
        ((2, 1, 16, 16), False),     # aligned single column tile
        ((2, 1, 128, 128), True),    # two column tiles -> 2-way parallel halves + sigmoid
        ((2, 110, 150), False),      # ragged column tail handled in the wrapper
        ((3, 20, 20), False),        # non-128-aligned full-width tile, odd batch
    ]
    for idx, (shape, logits) in enumerate(cases):
        key, k1, k2 = jax.random.split(key, 3)
        raw = jax.random.normal(k1, shape, dtype=jnp.float32)
        predicted = raw if logits else jax.nn.sigmoid(raw)
        label = (jax.random.uniform(k2, shape) < 0.3).astype(jnp.float32)

        loss = jax.block_until_ready(
            weighted_soft_dice_loss(predicted, label, v1=0.1, eps=1e-6,
                                    logits=logits))
        loss_ref = _reference(predicted, label, v1=0.1, eps=1e-6, logits=logits)
        assert jnp.allclose(loss, loss_ref, rtol=1e-5, atol=1e-5), \
            (idx, loss, loss_ref)

    print("KERNEL_OK")
</pallas_src>

<mosaic_0001>
module attributes {stable_mosaic.version = 11 : i64} {
  func.func @_wsd_kernel(%arg0: i32, %arg1: i32, %arg2: i32, %arg3: memref<2x256xf32, #tpu.memory_space<vmem>>, %arg4: memref<2x256xf32, #tpu.memory_space<vmem>>, %arg5: memref<2x128xf32, #tpu.memory_space<vmem>>, %arg6: memref<2x128xf32, #tpu.memory_space<vmem>>) attributes {dimension_semantics = [#tpu.dimension_semantics<parallel>, #tpu.dimension_semantics<parallel>, #tpu.dimension_semantics<arbitrary>], iteration_bounds = array<i64: 1, 1, 1>, scalar_prefetch = 0 : i64, scratch_operands = 0 : i64, tpu.core_type = #tpu.core_type<tc>, window_params = [{transform_indices = @transform_0, window_bounds = array<i64: 2, 256>}, {transform_indices = @transform_1, window_bounds = array<i64: 2, 256>}, {transform_indices = @transform_2, window_bounds = array<i64: 2, 128>}, {transform_indices = @transform_3, window_bounds = array<i64: 2, 128>}]} {
    %c0_i32 = arith.constant 0 : i32
    %0 = arith.cmpi eq, %arg2, %c0_i32 : i32
    %1 = arith.extui %0 : i1 to i32
    %c0_i32_0 = arith.constant 0 : i32
    %2 = arith.cmpi ne, %1, %c0_i32_0 : i32
    scf.if %2 {
      %cst_34 = arith.constant 0.000000e+00 : f32
      %51 = vector.broadcast %cst_34 : f32 to vector<2x128xf32>
      %c0_35 = arith.constant 0 : index
      %c0_36 = arith.constant 0 : index
      %52 = vector.load %arg5[%c0_35, %c0_36] : memref<2x128xf32, #tpu.memory_space<vmem>>, vector<2x128xf32>
      tpu.vector_store %arg5[%c0_35, %c0_36], %51 {strides = array<i32>} : memref<2x128xf32, #tpu.memory_space<vmem>>, vector<2x128xf32>,
      %cst_37 = arith.constant 0.000000e+00 : f32
      %53 = vector.broadcast %cst_37 : f32 to vector<2x128xf32>
      %c0_38 = arith.constant 0 : index
      %c0_39 = arith.constant 0 : index
      %54 = vector.load %arg6[%c0_38, %c0_39] : memref<2x128xf32, #tpu.memory_space<vmem>>, vector<2x128xf32>
      tpu.vector_store %arg6[%c0_38, %c0_39], %53 {strides = array<i32>} : memref<2x128xf32, #tpu.memory_space<vmem>>, vector<2x128xf32>,
    } else {
    }
    %c0 = arith.constant 0 : index
    %c0_1 = arith.constant 0 : index
    %3 = vector.load %arg3[%c0, %c0_1] : memref<2x256xf32, #tpu.memory_space<vmem>>, vector<2x128xf32>
    %c0_2 = arith.constant 0 : index
    %c0_3 = arith.constant 0 : index
    %4 = vector.load %arg4[%c0_2, %c0_3] : memref<2x256xf32, #tpu.memory_space<vmem>>, vector<2x128xf32>
    %cst = arith.constant 8.000000e-01 : f32
    %5 = vector.broadcast %cst : f32 to vector<2x128xf32>
    %6 = arith.mulf %4, %5 : vector<2x128xf32>
    %cst_4 = arith.constant 1.000000e-01 : f32
    %7 = vector.broadcast %cst_4 : f32 to vector<2x128xf32>
    %8 = arith.addf %6, %7 : vector<2x128xf32>
    %cst_5 = arith.constant 2.000000e+00 : f32
    %9 = vector.broadcast %cst_5 : f32 to vector<2x128xf32>
    %10 = arith.mulf %9, %3 : vector<2x128xf32>
    %cst_6 = arith.constant 1.000000e+00 : f32
    %11 = vector.broadcast %cst_6 : f32 to vector<2x128xf32>
    %12 = arith.subf %10, %11 : vector<2x128xf32>
    %13 = arith.mulf %8, %12 : vector<2x128xf32>
    %cst_7 = arith.constant 2.000000e+00 : f32
    %14 = vector.broadcast %cst_7 : f32 to vector<2x128xf32>
    %15 = arith.mulf %14, %4 : vector<2x128xf32>
    %cst_8 = arith.constant 1.000000e+00 : f32
    %16 = vector.broadcast %cst_8 : f32 to vector<2x128xf32>
    %17 = arith.subf %15, %16 : vector<2x128xf32>
    %18 = arith.mulf %8, %17 : vector<2x128xf32>
    %c0_9 = arith.constant 0 : index
    %c0_10 = arith.constant 0 : index
    %19 = vector.load %arg5[%c0_9, %c0_10] : memref<2x128xf32, #tpu.memory_space<vmem>>, vector<2x128xf32>
    %20 = arith.mulf %13, %18 : vector<2x128xf32>
    %21 = arith.addf %19, %20 : vector<2x128xf32>
    %c0_11 = arith.constant 0 : index
    %c0_12 = arith.constant 0 : index
    %22 = vector.load %arg5[%c0_11, %c0_12] : memref<2x128xf32, #tpu.memory_space<vmem>>, vector<2x128xf32>
    tpu.vector_store %arg5[%c0_11, %c0_12], %21 {strides = array<i32>} : memref<2x128xf32, #tpu.memory_space<vmem>>, vector<2x128xf32>,
    %c0_13 = arith.constant 0 : index
    %c0_14 = arith.constant 0 : index
    %23 = vector.load %arg6[%c0_13, %c0_14] : memref<2x128xf32, #tpu.memory_space<vmem>>, vector<2x128xf32>
    %24 = arith.addf %13, %18 : vector<2x128xf32>
    %25 = arith.addf %23, %24 : vector<2x128xf32>
    %c0_15 = arith.constant 0 : index
    %c0_16 = arith.constant 0 : index
    %26 = vector.load %arg6[%c0_15, %c0_16] : memref<2x128xf32, #tpu.memory_space<vmem>>, vector<2x128xf32>
    tpu.vector_store %arg6[%c0_15, %c0_16], %25 {strides = array<i32>} : memref<2x128xf32, #tpu.memory_space<vmem>>, vector<2x128xf32>,
    %c0_17 = arith.constant 0 : index
    %c128 = arith.constant 128 : index
    %27 = vector.load %arg3[%c0_17, %c128] : memref<2x256xf32, #tpu.memory_space<vmem>>, vector<2x128xf32>
    %c0_18 = arith.constant 0 : index
    %c128_19 = arith.constant 128 : index
    %28 = vector.load %arg4[%c0_18, %c128_19] : memref<2x256xf32, #tpu.memory_space<vmem>>, vector<2x128xf32>
    %cst_20 = arith.constant 8.000000e-01 : f32
    %29 = vector.broadcast %cst_20 : f32 to vector<2x128xf32>
    %30 = arith.mulf %28, %29 : vector<2x128xf32>
    %cst_21 = arith.constant 1.000000e-01 : f32
    %31 = vector.broadcast %cst_21 : f32 to vector<2x128xf32>
    %32 = arith.addf %30, %31 : vector<2x128xf32>
    %cst_22 = arith.constant 2.000000e+00 : f32
    %33 = vector.broadcast %cst_22 : f32 to vector<2x128xf32>
    %34 = arith.mulf %33, %27 : vector<2x128xf32>
    %cst_23 = arith.constant 1.000000e+00 : f32
    %35 = vector.broadcast %cst_23 : f32 to vector<2x128xf32>
    %36 = arith.subf %34, %35 : vector<2x128xf32>
    %37 = arith.mulf %32, %36 : vector<2x128xf32>
    %cst_24 = arith.constant 2.000000e+00 : f32
    %38 = vector.broadcast %cst_24 : f32 to vector<2x128xf32>
    %39 = arith.mulf %38, %28 : vector<2x128xf32>
    %cst_25 = arith.constant 1.000000e+00 : f32
    %40 = vector.broadcast %cst_25 : f32 to vector<2x128xf32>
    %41 = arith.subf %39, %40 : vector<2x128xf32>
    %42 = arith.mulf %32, %41 : vector<2x128xf32>
    %c0_26 = arith.constant 0 : index
    %c0_27 = arith.constant 0 : index
    %43 = vector.load %arg5[%c0_26, %c0_27] : memref<2x128xf32, #tpu.memory_space<vmem>>, vector<2x128xf32>
    %44 = arith.mulf %37, %42 : vector<2x128xf32>
    %45 = arith.addf %43, %44 : vector<2x128xf32>
    %c0_28 = arith.constant 0 : index
    %c0_29 = arith.constant 0 : index
    %46 = vector.load %arg5[%c0_28, %c0_29] : memref<2x128xf32, #tpu.memory_space<vmem>>, vector<2x128xf32>
    tpu.vector_store %arg5[%c0_28, %c0_29], %45 {strides = array<i32>} : memref<2x128xf32, #tpu.memory_space<vmem>>, vector<2x128xf32>,
    %c0_30 = arith.constant 0 : index
    %c0_31 = arith.constant 0 : index
    %47 = vector.load %arg6[%c0_30, %c0_31] : memref<2x128xf32, #tpu.memory_space<vmem>>, vector<2x128xf32>
    %48 = arith.addf %37, %42 : vector<2x128xf32>
    %49 = arith.addf %47, %48 : vector<2x128xf32>
    %c0_32 = arith.constant 0 : index
    %c0_33 = arith.constant 0 : index
    %50 = vector.load %arg6[%c0_32, %c0_33] : memref<2x128xf32, #tpu.memory_space<vmem>>, vector<2x128xf32>
    tpu.vector_store %arg6[%c0_32, %c0_33], %49 {strides = array<i32>} : memref<2x128xf32, #tpu.memory_space<vmem>>, vector<2x128xf32>,
    return
  }
  func.func @transform_0(%arg0: i32, %arg1: i32, %arg2: i32) -> (i32, i32) {
    %c1_i32 = arith.constant 1 : i32
    %0 = arith.muli %arg1, %c1_i32 : i32
    %1 = arith.addi %0, %arg2 : i32
    %c0_i32 = arith.constant 0 : i32
    return %arg0, %1 : i32, i32
  }
  func.func @transform_1(%arg0: i32, %arg1: i32, %arg2: i32) -> (i32, i32) {
    %c1_i32 = arith.constant 1 : i32
    %0 = arith.muli %arg1, %c1_i32 : i32
    %1 = arith.addi %0, %arg2 : i32
    %c0_i32 = arith.constant 0 : i32
    return %arg0, %1 : i32, i32
  }
  func.func @transform_2(%arg0: i32, %arg1: i32, %arg2: i32) -> (i32, i32) {
    %c0_i32 = arith.constant 0 : i32
    return %arg0, %arg1 : i32, i32
  }
  func.func @transform_3(%arg0: i32, %arg1: i32, %arg2: i32) -> (i32, i32) {
    %c0_i32 = arith.constant 0 : i32
    return %arg0, %arg1 : i32, i32
  }
}

</mosaic_0001>

<llo_original>
// kernel: tpu_custom_call.1
$region0: #{tpu_custom_call.1}
  #allocation0 [shape = 'u32[]', space=smem, size = 0x4, offset = 0x4, fixed_abs, tag = 'smem constant byte address 0x4 - core index']
  #allocation1 [shape = 'u32[144,128]{1,0:T(1,128)}', space=vmem, size = 0x12000, scoped, tag = 'internal scratch']
  %s0 = inlined_call_operand.hbm [shape: f32[2,256], index: 0, kind: input, shape index: {}]
  %s1 = inlined_call_operand.hbm [shape: f32[2,256], index: 1, kind: input, shape index: {}]
  %s2 = inlined_call_operand.hbm [shape: f32[2,128], index: 2, kind: output, shape index: {0}]
  %s3 = inlined_call_operand.hbm [shape: f32[2,128], index: 3, kind: output, shape index: {1}]
  %4 = xla_tuple %s2, %s3
  %s5 = sld [smem:[#allocation0]]
  $region38: #{tpu_custom_call.1} parent=0
    _
  %s7 = ssub.s32 1, %s5
  %s8 = scalar_select 0, %s7, %s5
  $region1: #{tpu_custom_call.1} parent=0
    #allocation2 [shape = 'u8[2048]{0}', space=vmem, size = 0x800, scoped, tag = 'input window, operand 0, single buffered']
    #allocation3 [shape = 's32[1]{0}', space=sflag, size = 0x4, scoped, tag = 'scoped memory for tpu_custom_call.1']
    #allocation4 [shape = 's32[1]{0}', space=sflag, size = 0x4, scoped, tag = 'scoped memory for tpu_custom_call.1']
    #allocation5 [shape = 'u8[2048]{0}', space=vmem, size = 0x800, scoped, tag = 'input window, operand 1, single buffered']
    #allocation6 [shape = 's32[1]{0}', space=sflag, size = 0x4, scoped, tag = 'scoped memory for tpu_custom_call.1']
    #allocation7 [shape = 'u8[1024]{0}', space=vmem, size = 0x400, scoped, tag = 'output window, operand 0, single buffered']
    #allocation8 [shape = 'u8[1024]{0}', space=vmem, size = 0x400, scoped, tag = 'output window, operand 1, single buffered']
    #allocation9 [shape = 's32[1]{0}', space=sflag, size = 0x4, scoped, tag = 'scoped memory for tpu_custom_call.1']
    %9 = vsyncpa [#allocation3], 0
    %10 = vsyncpa [#allocation6], 0
    %11 = vsyncpa [#allocation4], 0
    %12 = vsyncpa [#allocation9], 0
    // Predicated region
    $region2: #{tpu_custom_call.1} parent=1 // pred_check
      _
    $region3: #{tpu_custom_call.1} parent=1 // pred_check_branch
      %14 = sbr.rel (0) target = $region5
    $region4: #{tpu_custom_call.1} parent=1 // pred_region
      %s15 = sadd.s32 0, 0
      %s16 = smul.u32 2, %s15
      %s18 = ssub.s32 64, 64
      %19 = vsyncadd [#allocation3], %s18
      %s20 = smul.addr %s16, 32
      %s21 = scalar_lea.hbm %s0, %s20
      %s23 = sshll.u32 [#allocation2], 4
      %s24 = int_to_ptr.vmem [resolvable:$true] %s23
      %26 = dma.hbm_to_vmem [thread:$0]  %s21, 64, %s24, [#allocation3]
    $region5: #{tpu_custom_call.1} parent=1 // pred_fallthru
      _
    // Predicated region
    $region6: #{tpu_custom_call.1} parent=1 // pred_check
      _
    $region7: #{tpu_custom_call.1} parent=1 // pred_check_branch
      %28 = sbr.rel (0) target = $region9
    $region8: #{tpu_custom_call.1} parent=1 // pred_region
      %s29 = sadd.s32 0, 0
      %s30 = smul.u32 2, %s29
      %s32 = ssub.s32 64, 64
      %33 = vsyncadd [#allocation6], %s32
      %s34 = smul.addr %s30, 32
      %s35 = scalar_lea.hbm %s1, %s34
      %s37 = sshll.u32 [#allocation5], 4
      %s38 = int_to_ptr.vmem [resolvable:$true] %s37
      %40 = dma.hbm_to_vmem [thread:$0]  %s35, 64, %s38, [#allocation6]
    $region9: #{tpu_custom_call.1} parent=1 // pred_fallthru
      _
    // Predicated region
    $region10: #{tpu_custom_call.1} parent=1 // pred_check
      _
    $region11: #{tpu_custom_call.1} parent=1 // pred_check_branch
      %42 = sbr.rel (0) target = $region13
    $region12: #{tpu_custom_call.1} parent=1 // pred_region
      %43 = dma.done [#allocation3], 64
    $region13: #{tpu_custom_call.1} parent=1 // pred_fallthru
      _
    // Predicated region
    $region14: #{tpu_custom_call.1} parent=1 // pred_check
      _
    $region15: #{tpu_custom_call.1} parent=1 // pred_check_branch
      %45 = sbr.rel (0) target = $region17
    $region16: #{tpu_custom_call.1} parent=1 // pred_region
      %46 = dma.done [#allocation6], 64
    $region17: #{tpu_custom_call.1} parent=1 // pred_fallthru
      _
    %s47 = sadd.s32 0, 0
    %s48 = smul.u32 2, %s47
    %s49 = sadd.s32 0, 0
    %s50 = smul.u32 2, %s49
    %p51 = scmp.eq.s32.totalorder 0, 0
    // Predicated region
    $region18: #{tpu_custom_call.1} parent=1 // pred_check
      %p52 = pneg %p51
    $region19: #{tpu_custom_call.1} parent=1 // pred_check_branch
      %54 = sbr.rel (%p52) target = $region21
    $region20: #{tpu_custom_call.1} parent=1 // pred_region
      %55 = vst [vmem:[#allocation7] sm:$0x3] 0.0
      %56 = vst [vmem:[#allocation8] sm:$0x3] 0.0
    $region21: #{tpu_custom_call.1} parent=1 // pred_fallthru
      _
    %v57 = vld [vmem:[#allocation2] sm:$0x3]
    %v58 = vld [vmem:[#allocation5] sm:$0x3]
    %v59 = vmul.f32 %v58, 0.8
    %v60 = vadd.f32 %v59, 0.1
    %v61 = vmul.f32 %v57, 2.0
    %v62 = vsub.f32 %v61, 1.0
    %v63 = vmul.f32 %v60, %v62
    %v64 = vmul.f32 %v58, 2.0
    %v65 = vsub.f32 %v64, 1.0
    %v66 = vmul.f32 %v60, %v65
    %v67 = vld [vmem:[#allocation7] sm:$0x3]
    %v68 = vmul.f32 %v63, %v66
    %v69 = vadd.f32 %v67, %v68
    %70 = vst [vmem:[#allocation7] sm:$0x3] %v69
    %v71 = vld [vmem:[#allocation8] sm:$0x3]
    %v72 = vadd.f32 %v63, %v66
    %v73 = vadd.f32 %v71, %v72
    %74 = vst [vmem:[#allocation8] sm:$0x3] %v73
    %v75 = vld [vmem:[#allocation2 + $0x2] sm:$0x3]
    %v76 = vld [vmem:[#allocation5 + $0x2] sm:$0x3]
    %v77 = vmul.f32 %v76, 0.8
    %v78 = vadd.f32 %v77, 0.1
    %v79 = vmul.f32 %v75, 2.0
    %v80 = vsub.f32 %v79, 1.0
    %v81 = vmul.f32 %v78, %v80
    %v82 = vmul.f32 %v76, 2.0
    %v83 = vsub.f32 %v82, 1.0
    %v84 = vmul.f32 %v78, %v83
    %v85 = vld [vmem:[#allocation7] sm:$0x3]
    %v86 = vmul.f32 %v81, %v84
    %v87 = vadd.f32 %v85, %v86
    %88 = vst [vmem:[#allocation7] sm:$0x3] %v87
    %v89 = vld [vmem:[#allocation8] sm:$0x3]
    %v90 = vadd.f32 %v81, %v84
    %v91 = vadd.f32 %v89, %v90
    %92 = vst [vmem:[#allocation8] sm:$0x3] %v91
    // Predicated region
    $region22: #{tpu_custom_call.1} parent=1 // pred_check
      _
    $region23: #{tpu_custom_call.1} parent=1 // pred_check_branch
      %94 = sbr.rel (0) target = $region25
    $region24: #{tpu_custom_call.1} parent=1 // pred_region
      %s96 = ssub.s32 32, 32
      %97 = vsyncadd [#allocation4], %s96
      %s99 = sshll.u32 [#allocation7], 4
      %s100 = int_to_ptr.vmem [resolvable:$true] %s99
      %102 = dma.vmem_to_hbm [thread:$0]  %s100, 32, %s2, [#allocation4]
    $region25: #{tpu_custom_call.1} parent=1 // pred_fallthru
      _
    // Predicated region
    $region26: #{tpu_custom_call.1} parent=1 // pred_check
      _
    $region27: #{tpu_custom_call.1} parent=1 // pred_check_branch
      %104 = sbr.rel (0) target = $region29
    $region28: #{tpu_custom_call.1} parent=1 // pred_region
      %s106 = ssub.s32 32, 32
      %107 = vsyncadd [#allocation9], %s106
      %s109 = sshll.u32 [#allocation8], 4
      %s110 = int_to_ptr.vmem [resolvable:$true] %s109
      %112 = dma.vmem_to_hbm [thread:$0]  %s110, 32, %s3, [#allocation9]
    $region29: #{tpu_custom_call.1} parent=1 // pred_fallthru
      _
    // Predicated region
    $region30: #{tpu_custom_call.1} parent=1 // pred_check
      _
    $region31: #{tpu_custom_call.1} parent=1 // pred_check_branch
      %114 = sbr.rel (0) target = $region33
    $region32: #{tpu_custom_call.1} parent=1 // pred_region
      %115 = dma.done [#allocation4], 32
    $region33: #{tpu_custom_call.1} parent=1 // pred_fallthru
      _
    // Predicated region
    $region34: #{tpu_custom_call.1} parent=1 // pred_check
      _
    $region35: #{tpu_custom_call.1} parent=1 // pred_check_branch
      %117 = sbr.rel (0) target = $region37
    $region36: #{tpu_custom_call.1} parent=1 // pred_region
      %118 = dma.done [#allocation9], 32
    $region37: #{tpu_custom_call.1} parent=1 // pred_fallthru
      _
    %119 = vsyncpa [#allocation3], 1
    %120 = vsyncpa [#allocation6], 1
    %121 = vsyncpa [#allocation4], 1
    %122 = vsyncpa [#allocation9], 1

</llo_original>
